<compile_context>
chip_gen: v5e
topology: v5e:2x2
jax: 0.10.0
libtpu: 0.0.40
codegen_flags: <defaults>
</compile_context>

<pallas_src>
import functools

import jax
import jax.numpy as jnp
import numpy as np
from jax import lax
from jax.experimental import pallas as pl
from jax.experimental.pallas import tpu as pltpu

LANE = 128
BF16_SUBLANE = 16                       # bf16 sublane-packing multiple
VMEM_LIMIT = 32 * 1024 * 1024           # scoped VMEM we request from Mosaic
VMEM_TILE_BUDGET = VMEM_LIMIT // 2      # keep double-buffered tiles under half


def _round_up(x, m):
    return ((x + m - 1) // m) * m


# ----------------------------- Pallas kernel --------------------------------
def _conv_mm_relu_kernel(w_ref, b_ref, a_ref, o_ref):
    # w_ref: (nout, Kp)  bf16  flattened conv weights (resident across grid)
    # b_ref: (nout, 1)   f32   bias (resident)
    # a_ref: (Kp, TM)    bf16  per-image im2col patches^T tile (pixels on lanes)
    # o_ref: (nout, TM)  f32   output tile
    acc = jnp.dot(w_ref[...], a_ref[...], preferred_element_type=jnp.float32)
    acc = acc + b_ref[...]                       # bias broadcast over lanes
    o_ref[...] = jnp.maximum(acc, 0.0).astype(o_ref.dtype)


# ----------------------------- im2col (fused) -------------------------------
def _im2col_bf16(x, k, s, Kp, OHWp):
    """x: (N, C, H, W) f32 -> (N, Kp, OHWp) bf16 patches, per-image transposed.

    Rows are ordered (c, kh, kw) C-order (== PyTorch weight.reshape(nout, C*k*k));
    columns are (oh, ow). No transpose is needed: the reshape only collapses
    adjacent dims, and cast + pad are applied on the bf16 result in one pass.
    """
    N, C, H, W = x.shape
    OH = (H - k) // s + 1
    OW = (W - k) // s + 1
    xb = x.astype(jnp.bfloat16)                  # cast once, before slicing
    cols = []
    for i in range(k):
        for j in range(k):
            cols.append(xb[:, :, i:i + s * OH:s, j:j + s * OW:s])   # (N,C,OH,OW)
    p = jnp.stack(cols, axis=2)                  # (N, C, k*k, OH, OW)
    p = p.reshape(N, C * k * k, OH * OW)         # free reshape -> (N, K, OHW)
    p = jnp.pad(p, ((0, 0), (0, Kp - C * k * k), (0, OHWp - OH * OW)))
    return p


# ------------------------------- wrapper -------------------------------------
@functools.partial(jax.jit, static_argnames=("k", "s"))
def cnn_forward(x, weight, bias, *, k=5, s=1):
    """Pallas implementation of F.relu(Conv2d(nin, nout, k, s)(x)).

    x:      (N, nin, H, W)  float32  (NCHW, matching PyTorch)
    weight: (nout, nin, k, k)
    bias:   (nout,)
    returns (N, nout, OH, OW)  float32
    """
    N, nin, H, W = x.shape
    nout = weight.shape[0]
    OH = (H - k) // s + 1
    OW = (W - k) // s + 1
    OHW = OH * OW
    K = nin * k * k

    Kp = _round_up(K, BF16_SUBLANE)              # 112 for K=100, not 128

    # TM: largest lane tile (multiple of 128, <= 2048 to amortize the ~0.35us
    # per-step overhead) whose double-buffered A tile + output tile fit in half
    # the scoped VMEM budget.  N is a separate "parallel" grid axis, so v7x's
    # two TensorCores always have >= 2 blocks to split.
    tm_cap = 2048
    while tm_cap > LANE and 2 * (Kp * tm_cap * 2 + nout * tm_cap * 4) > VMEM_TILE_BUDGET:
        tm_cap //= 2
    TM = min(_round_up(OHW, LANE), tm_cap)
    OHWp = _round_up(OHW, TM)
    grid = (N, OHWp // TM)

    # TODO(synk): for very large activations, move im2col inside the kernel
    # (x with memory_space=pl.ANY + k*k shifted-matmul accumulation) to avoid
    # the k*k=25x HBM expansion; at these sizes everything fits in VMEM.
    a_p = _im2col_bf16(x, k, s, Kp, OHWp)                            # (N, Kp, OHWp) bf16
    w_p = jnp.pad(weight.reshape(nout, K), ((0, 0), (0, Kp - K))).astype(jnp.bfloat16)
    b_p = bias.reshape(nout, 1).astype(jnp.float32)

    out_p = pl.pallas_call(
        _conv_mm_relu_kernel,
        out_shape=jax.ShapeDtypeStruct((N, nout, OHWp), jnp.float32),
        grid_spec=pltpu.PrefetchScalarGridSpec(
            num_scalar_prefetch=0,
            grid=grid,
            in_specs=[
                pl.BlockSpec((nout, Kp), lambda n, i: (0, 0)),        # weights (resident)
                pl.BlockSpec((nout, 1), lambda n, i: (0, 0)),         # bias (resident)
                pl.BlockSpec((None, Kp, TM), lambda n, i: (n, 0, i)),  # patches^T tile
            ],
            out_specs=pl.BlockSpec((None, nout, TM), lambda n, i: (n, 0, i)),
        ),
        compiler_params=pltpu.CompilerParams(
            dimension_semantics=("parallel", "parallel"),
            vmem_limit_bytes=VMEM_LIMIT,
        ),
    )(w_p, b_p, a_p)

    # Slice off padded output pixels (they hold relu(bias)) and reshape — no
    # transpose needed since the layout is already (N, nout, oh*ow).
    out = out_p[:, :, :OHW].reshape(N, nout, OH, OW)
    return out


# ------------------------------ reference -----------------------------------
def _reference(x, weight, bias, s):
    y = lax.conv_general_dilated(
        x, weight, window_strides=(s, s), padding="VALID",
        dimension_numbers=("NCHW", "OIHW", "NCHW"))
    y = y + bias[None, :, None, None]
    return jnp.maximum(y, 0.0)


if __name__ == "__main__":
    key = jax.random.PRNGKey(0)
    kx, kw, kb = jax.random.split(key, 3)

    # Small shapes consistent with the module: nin=4 -> nout=8, 16x16 spatial.
    N, nin, H, W = 2, 4, 16, 16
    nout, k, s = 8, 5, 1

    x = jax.random.normal(kx, (N, nin, H, W), jnp.float32)
    # Deterministic PyTorch-like init (uniform in +-1/sqrt(fan_in)).
    fan_in = nin * k * k
    bound = 1.0 / np.sqrt(fan_in)
    weight = jax.random.uniform(kw, (nout, nin, k, k), jnp.float32, -bound, bound)
    bias = jax.random.uniform(kb, (nout,), jnp.float32, -bound, bound)

    out = jax.block_until_ready(cnn_forward(x, weight, bias, k=k, s=s))
    ref = jax.block_until_ready(_reference(x, weight, bias, s))

    assert out.shape == ref.shape == (N, nout, H - k + 1, W - k + 1)
    # bf16 matmul operands (f32 accumulation) -> relaxed tolerance.
    np.testing.assert_allclose(np.asarray(out), np.asarray(ref), rtol=2e-2, atol=2e-2)

    print("KERNEL_OK")
</pallas_src>

<mosaic_0001>
module attributes {stable_mosaic.version = 11 : i64} {
  func.func @_conv_mm_relu_kernel(%arg0: i32, %arg1: i32, %arg2: memref<8x112xbf16, #tpu.memory_space<vmem>>, %arg3: memref<8x1xf32, #tpu.memory_space<vmem>>, %arg4: memref<1x112x256xbf16, #tpu.memory_space<vmem>>, %arg5: memref<1x8x256xf32, #tpu.memory_space<vmem>>) attributes {dimension_semantics = [#tpu.dimension_semantics<parallel>, #tpu.dimension_semantics<parallel>], iteration_bounds = array<i64: 2, 1>, scalar_prefetch = 0 : i64, scratch_operands = 0 : i64, tpu.core_type = #tpu.core_type<tc>, window_params = [{pipeline_mode = #tpu.pipeline_mode<synchronous>, transform_indices = @transform_0, window_bounds = array<i64: 8, 112>}, {pipeline_mode = #tpu.pipeline_mode<synchronous>, transform_indices = @transform_1, window_bounds = array<i64: 8, 1>}, {transform_indices = @transform_2, window_bounds = array<i64: 1, 112, 256>}, {transform_indices = @transform_3, window_bounds = array<i64: 1, 8, 256>}]} {
    %c0 = arith.constant 0 : index
    %c0_0 = arith.constant 0 : index
    %0 = vector.load %arg2[%c0, %c0_0] : memref<8x112xbf16, #tpu.memory_space<vmem>>, vector<8x112xbf16>
    %c0_1 = arith.constant 0 : index
    %c0_2 = arith.constant 0 : index
    %c0_3 = arith.constant 0 : index
    %1 = vector.load %arg4[%c0_1, %c0_2, %c0_3] : memref<1x112x256xbf16, #tpu.memory_space<vmem>>, vector<1x112x256xbf16>
    %2 = vector.shape_cast %1 : vector<1x112x256xbf16> to vector<112x256xbf16>
    %cst = arith.constant dense<0.000000e+00> : vector<8x256xf32>
    %3 = tpu.matmul %0, %2, %cst {dimension_numbers = #tpu.dot_dimension_numbers<[1], [0], [0], [1], [0, 0, 1, 1], [], []>} : vector<8x112xbf16>, vector<112x256xbf16>, vector<8x256xf32> -> vector<8x256xf32>
    %c0_4 = arith.constant 0 : index
    %c0_5 = arith.constant 0 : index
    %4 = vector.load %arg3[%c0_4, %c0_5] : memref<8x1xf32, #tpu.memory_space<vmem>>, vector<8x1xf32>
    %5 = vector.broadcast %4 : vector<8x1xf32> to vector<8x256xf32>
    %6 = arith.addf %3, %5 : vector<8x256xf32>
    %cst_6 = arith.constant 0.000000e+00 : f32
    %7 = vector.broadcast %cst_6 : f32 to vector<8x256xf32>
    %8 = arith.maximumf %6, %7 : vector<8x256xf32>
    %c0_7 = arith.constant 0 : index
    %c0_8 = arith.constant 0 : index
    %c0_9 = arith.constant 0 : index
    %9 = vector.load %arg5[%c0_7, %c0_8, %c0_9] : memref<1x8x256xf32, #tpu.memory_space<vmem>>, vector<1x8x256xf32>
    %10 = vector.shape_cast %9 : vector<1x8x256xf32> to vector<8x256xf32>
    %11 = vector.shape_cast %8 : vector<8x256xf32> to vector<1x8x256xf32>
    tpu.vector_store %arg5[%c0_7, %c0_8, %c0_9], %11 {strides = array<i32>} : memref<1x8x256xf32, #tpu.memory_space<vmem>>, vector<1x8x256xf32>,
    return
  }
  func.func @transform_0(%arg0: i32, %arg1: i32) -> (i32, i32) {
    %c0_i32 = arith.constant 0 : i32
    %c0_i32_0 = arith.constant 0 : i32
    %c0_i32_1 = arith.constant 0 : i32
    return %c0_i32, %c0_i32_0 : i32, i32
  }
  func.func @transform_1(%arg0: i32, %arg1: i32) -> (i32, i32) {
    %c0_i32 = arith.constant 0 : i32
    %c0_i32_0 = arith.constant 0 : i32
    %c0_i32_1 = arith.constant 0 : i32
    return %c0_i32, %c0_i32_0 : i32, i32
  }
  func.func @transform_2(%arg0: i32, %arg1: i32) -> (i32, i32, i32) {
    %c0_i32 = arith.constant 0 : i32
    %c0_i32_0 = arith.constant 0 : i32
    return %arg0, %c0_i32, %arg1 : i32, i32, i32
  }
  func.func @transform_3(%arg0: i32, %arg1: i32) -> (i32, i32, i32) {
    %c0_i32 = arith.constant 0 : i32
    %c0_i32_0 = arith.constant 0 : i32
    return %arg0, %c0_i32, %arg1 : i32, i32, i32
  }
}

</mosaic_0001>

<llo_original>
// kernel: cnn_forward.1
$region0: #{cnn_forward.1}
  #allocation0 [shape = 'u32[]', space=smem, size = 0x4, offset = 0x4, fixed_abs, tag = 'smem constant byte address 0x4 - core index']
  #allocation1 [shape = 'u32[72,128]{1,0:T(1,128)}', space=vmem, size = 0x9000, scoped, tag = 'internal scratch']
  %s0 = inlined_call_operand.vmem [shape: bf16[8,112], index: 0, kind: input, shape index: {}]
  %s1 = inlined_call_operand.vmem [shape: f32[8,1], index: 1, kind: input, shape index: {}]
  %s2 = inlined_call_operand.vmem [shape: bf16[2,112,256], index: 2, kind: input, shape index: {}]
  %s3 = inlined_call_operand.vmem [shape: f32[2,8,256], index: 3, kind: output, shape index: {}]
  %s4 = sld [smem:[#allocation0]]
  $region45: #{cnn_forward.1} parent=0
    _
  %s6 = ssub.s32 1, %s4
  %s7 = scalar_select 0, %s6, %s4
  loop: start=0, step=1, limit=4
  $region2: #{cnn_forward.1} parent=0 // loop_pre_header
    _
  $region3: #{cnn_forward.1} parent=0 // loop_header
    %s9 = sphi 0, %s13
    %p10 = scmp.ge.s32.totalorder %s9, 4
    %s16 = sphi 0, %s28
    %s17 = sphi 0, %s24
    %s18 = sphi 0, %s16
    %s19 = sphi 0, %s17
    %s20 = sphi 0, %s18
    %s21 = sphi 0, %s19
    %s29 = sphi 0, %s29
    %s31 = sphi 0, %s29
    %s32 = sphi 0, %s31
    %s46 = sphi 0, %s32
    %s50 = sphi 0, %s50
    %s52 = sphi 0, %s50
    %s53 = sphi 0, %s52
    %s67 = sphi 0, %s53
    %s75 = sphi 0, %s77
    %s78 = sphi 0, %s75
    %s79 = sphi 0, %s78
    %s95 = sphi 0, %s79
    %s103 = sphi 0, %s105
    %s106 = sphi 0, %s103
    %s107 = sphi 0, %s106
    %s123 = sphi 0, %s107
  $region4: #{cnn_forward.1} parent=0 // loop_header_branch
    %12 = sbr.rel (%p10) target = $region8
  $region5: #{cnn_forward.1} parent=0 // loop_body
    %s14 = ssub.s32 %s9, 1
    %s15 = ssub.s32 %s9, 2
    %s22 = sadd.s32 1, %s17
    %p23 = scmp.ge.s32.totalorder %s22, 1
    %s24 = scalar_select %p23, 0, %s22
    %s25 = sadd.s32 1, %s16
    %s26 = scalar_select %p23, %s25, %s16
    %p27 = scmp.ge.s32.totalorder %s26, 2
    %s28 = scalar_select %p27, 0, %s26
    %s30 = sadd.s32 %s29, 1
    %p33 = scmp.eq.s32.totalorder %s9, 1
    %p34 = scmp.ne.s32.totalorder %s29, %s31
    %p35 = scmp.eq.s32.totalorder %s9, 0
    %p36 = por %p34, %p35
    %p37 = scmp.ne.s32.totalorder %s29, %s31
    %p38 = scmp.eq.s32.totalorder %s14, 1
    %p39 = por %p37, %p38
    %p40 = scmp.ne.s32.totalorder %s31, %s32
    %p41 = scmp.eq.s32.totalorder %s14, 0
    %p42 = por %p40, %p41
    %p43 = scmp.ne.s32.totalorder %s31, %s32
    %p44 = scmp.eq.s32.totalorder %s15, 1
    %p45 = por %p43, %p44
    %p47 = scmp.ne.s32.totalorder %s32, %s46
    %p48 = scmp.eq.s32.totalorder %s15, 0
    %p49 = por %p47, %p48
    %s51 = sadd.s32 %s50, 1
    %p54 = scmp.eq.s32.totalorder %s9, 1
    %p55 = scmp.ne.s32.totalorder %s50, %s52
    %p56 = scmp.eq.s32.totalorder %s9, 0
    %p57 = por %p55, %p56
    %p58 = scmp.ne.s32.totalorder %s50, %s52
    %p59 = scmp.eq.s32.totalorder %s14, 1
    %p60 = por %p58, %p59
    %p61 = scmp.ne.s32.totalorder %s52, %s53
    %p62 = scmp.eq.s32.totalorder %s14, 0
    %p63 = por %p61, %p62
    %p64 = scmp.ne.s32.totalorder %s52, %s53
    %p65 = scmp.eq.s32.totalorder %s15, 1
    %p66 = por %p64, %p65
    %p68 = scmp.ne.s32.totalorder %s53, %s67
    %p69 = scmp.eq.s32.totalorder %s15, 0
    %p70 = por %p68, %p69
    %s71 = ssub.s32 %s16, %s28
    %s72 = ssub.s32 %s17, %s24
    %s73 = sor.u32 %s71, %s72
    %p74 = scmp.eq.s32.totalorder %s73, 0
    %s76 = sadd.s32 %s75, 1
    %s77 = scalar_select %p74, %s75, %s76
    %p80 = pneg %p74
    %p81 = scmp.eq.s32.totalorder %s9, 1
    %p82 = por %p80, %p81
    %p83 = scmp.ne.s32.totalorder %s75, %s78
    %p84 = scmp.eq.s32.totalorder %s9, 0
    %p85 = por %p83, %p84
    %p86 = scmp.ne.s32.totalorder %s75, %s78
    %p87 = scmp.eq.s32.totalorder %s14, 1
    %p88 = por %p86, %p87
    %p89 = scmp.ne.s32.totalorder %s78, %s79
    %p90 = scmp.eq.s32.totalorder %s14, 0
    %p91 = por %p89, %p90
    %p92 = scmp.ne.s32.totalorder %s78, %s79
    %p93 = scmp.eq.s32.totalorder %s15, 1
    %p94 = por %p92, %p93
    %p96 = scmp.ne.s32.totalorder %s79, %s95
    %p97 = scmp.eq.s32.totalorder %s15, 0
    %p98 = por %p96, %p97
    %s99 = ssub.s32 %s16, %s28
    %s100 = ssub.s32 %s17, %s24
    %s101 = sor.u32 %s99, %s100
    %p102 = scmp.eq.s32.totalorder %s101, 0
    %s104 = sadd.s32 %s103, 1
    %s105 = scalar_select %p102, %s103, %s104
    %p108 = pneg %p102
    %p109 = scmp.eq.s32.totalorder %s9, 1
    %p110 = por %p108, %p109
    %p111 = scmp.ne.s32.totalorder %s103, %s106
    %p112 = scmp.eq.s32.totalorder %s9, 0
    %p113 = por %p111, %p112
    %p114 = scmp.ne.s32.totalorder %s103, %s106
    %p115 = scmp.eq.s32.totalorder %s14, 1
    %p116 = por %p114, %p115
    %p117 = scmp.ne.s32.totalorder %s106, %s107
    %p118 = scmp.eq.s32.totalorder %s14, 0
    %p119 = por %p117, %p118
    %p120 = scmp.ne.s32.totalorder %s106, %s107
    %p121 = scmp.eq.s32.totalorder %s15, 1
    %p122 = por %p120, %p121
    %p124 = scmp.ne.s32.totalorder %s107, %s123
    %p125 = scmp.eq.s32.totalorder %s15, 0
    %p126 = por %p124, %p125
    %p127 = scmp.le.s32.totalorder 1, %s9
    %p128 = scmp.lt.s32.totalorder %s9, 3
    %p129 = pnand %p127, %p128
    %p130 = pneg %p129
    // Predicated region
    $region9: #{cnn_forward.1} parent=5 // pred_check
      _
    $region10: #{cnn_forward.1} parent=5 // pred_check_branch
      %132 = sbr.rel (%p129) target = $region12
    $region11: #{cnn_forward.1} parent=5 // pred_region
      %s133 = ssub.s32 %s9, 1
      // Predicated region
      $region13: #{cnn_forward.1} parent=11 // pred_check
        %p134 = pneg %p42
      $region14: #{cnn_forward.1} parent=11 // pred_check_branch
        %136 = sbr.rel (%p134) target = $region16
      $region15: #{cnn_forward.1} parent=11 // pred_region
        _
      $region16: #{cnn_forward.1} parent=11 // pred_fallthru
        _
      // Predicated region
      $region17: #{cnn_forward.1} parent=11 // pred_check
        %p137 = pneg %p63
      $region18: #{cnn_forward.1} parent=11 // pred_check_branch
        %139 = sbr.rel (%p137) target = $region20
      $region19: #{cnn_forward.1} parent=11 // pred_region
        _
      $region20: #{cnn_forward.1} parent=11 // pred_fallthru
        _
    $region12: #{cnn_forward.1} parent=5 // pred_fallthru
      _
    %p140 = scmp.lt.s32.totalorder %s9, 2
    // Predicated region
    $region21: #{cnn_forward.1} parent=5 // pred_check
      %p141 = pneg %p140
    $region22: #{cnn_forward.1} parent=5 // pred_check_branch
      %143 = sbr.rel (%p141) target = $region24
    $region23: #{cnn_forward.1} parent=5 // pred_region
      // Predicated region
      $region25: #{cnn_forward.1} parent=23 // pred_check
        %p144 = pneg %p85
      $region26: #{cnn_forward.1} parent=23 // pred_check_branch
        %146 = sbr.rel (%p144) target = $region28
      $region27: #{cnn_forward.1} parent=23 // pred_region
        %s147 = smul.u32 2, %s17
        %p148 = scmp.lt.s32.totalorder %s16, 1
        %s149 = scalar_select %p148, %s16, 1
        %p150 = scmp.lt.s32.totalorder %s147, 1
        %s151 = scalar_select %p150, %s147, 1
        %s152 = smul.addr %s149, 28
        %s153 = sadd.s32 %s151, %s152
        %s154 = smul.addr %s153, 4
        %s155 = scalar_lea.vmem %s2, %s154
        %s156 = smul.u32 2, %s17
      $region28: #{cnn_forward.1} parent=23 // pred_fallthru
        _
    $region24: #{cnn_forward.1} parent=5 // pred_fallthru
      _
    %p157 = scmp.le.s32.totalorder 1, %s9
    %p158 = scmp.lt.s32.totalorder %s9, 3
    %p159 = pnand %p157, %p158
    %p160 = pneg %p159
    // Predicated region
    $region29: #{cnn_forward.1} parent=5 // pred_check
      _
    $region30: #{cnn_forward.1} parent=5 // pred_check_branch
      %162 = sbr.rel (%p159) target = $region32
    $region31: #{cnn_forward.1} parent=5 // pred_region
      %s163 = ssub.s32 %s9, 1
      %p164 = pneg %p42
      %p165 = pneg %p39
      %p166 = pneg %p63
      %p167 = pneg %p60
      %s168 = smul.u32 2, %s19
      %p169 = scmp.lt.s32.totalorder %s18, 1
      %s170 = scalar_select %p169, %s18, 1
      %p171 = scmp.lt.s32.totalorder %s168, 1
      %s172 = scalar_select %p171, %s168, 1
      %s173 = smul.addr %s170, 28
      %s174 = sadd.s32 %s172, %s173
      %s175 = smul.addr %s174, 4
      %s176 = scalar_lea.vmem %s2, %s175
      %p177 = pneg %p91
      %p178 = pneg %p88
      %p179 = pneg %p119
      %p180 = pneg %p116
      %s181 = smul.u32 2, %s19
      %p182 = scmp.lt.s32.totalorder %s18, 1
      %s183 = scalar_select %p182, %s18, 1
      %p184 = scmp.lt.s32.totalorder %s181, 1
      %s185 = scalar_select %p184, %s181, 1
      %s186 = smul.addr %s183, 2
      %s187 = sadd.s32 %s185, %s186
      %s188 = smul.addr %s187, 8
      %s189 = scalar_lea.vmem %s3, %s188
      %s190 = smul.u32 2, %s19
      %p191 = scmp.lt.s32.totalorder %s18, 1
      %s192 = scalar_select %p191, %s18, 1
      %p193 = scmp.lt.s32.totalorder %s190, 1
      %s194 = scalar_select %p193, %s190, 1
      %s195 = smul.addr %s192, 28
      %s196 = sadd.s32 %s194, %s195
      %s197 = smul.addr %s196, 4
      %s198 = scalar_lea.vmem %s2, %s197
      %s199 = smul.u32 2, %s19
      %s200 = smul.u32 2, %s19
      %p201 = scmp.lt.s32.totalorder %s18, 1
      %s202 = scalar_select %p201, %s18, 1
      %p203 = scmp.lt.s32.totalorder %s200, 1
      %s204 = scalar_select %p203, %s200, 1
      %s205 = smul.addr %s202, 2
      %s206 = sadd.s32 %s204, %s205
      %s207 = smul.addr %s206, 8
      %s208 = scalar_lea.vmem %s3, %s207
      %s209 = smul.u32 2, %s19
      %v211 = vld [vmem:[%s0] sm:$0xf]
      %v212 = vld [vmem:[%s198] sm:$0xff]
      %v213 = vld [vmem:[%s198 + $0x8] sm:$0xff]
      %v214 = vld [vmem:[%s198 + $0x10] sm:$0xff]
      %v215 = vld [vmem:[%s198 + $0x18] sm:$0xff]
      %v216 = vld [vmem:[%s198 + $0x20] sm:$0xff]
      %v217 = vld [vmem:[%s198 + $0x28] sm:$0xff]
      %v218 = vld [vmem:[%s198 + $0x30] sm:$0xff]
      %v219 = vld [vmem:[%s198 + $0x38] sm:$0xff]
      %v220 = vld [vmem:[%s198 + $0x40] sm:$0xff]
      %v221 = vld [vmem:[%s198 + $0x48] sm:$0xff]
      %v222 = vld [vmem:[%s198 + $0x50] sm:$0xff]
      %v223 = vld [vmem:[%s198 + $0x58] sm:$0xff]
      %v224 = vld [vmem:[%s198 + $0x60] sm:$0xff]
      %v225 = vld [vmem:[%s198 + $0x68] sm:$0xff]
      %v226 = vld [vmem:[%s1] sm:$0xff]
      %228 = vset.pattern.permute.xlu0 0
      %229 = vperm.xlu0 %228, %v226
      %v230 = vpop.permute.xlu0 %229
      %v246 = vunpack.c.l.b16 %v212
      %v247 = vunpack.c.h.b16 %v212
      %v248 = vunpack.c.l.b16 %v213
      %v249 = vunpack.c.h.b16 %v213
      %v250 = vunpack.c.l.b16 %v214
      %v251 = vunpack.c.h.b16 %v214
      %v252 = vunpack.c.l.b16 %v215
      %v253 = vunpack.c.h.b16 %v215
      %v254 = vunpack.c.l.b16 %v216
      %v255 = vunpack.c.h.b16 %v216
      %v256 = vunpack.c.l.b16 %v217
      %v257 = vunpack.c.h.b16 %v217
      %v258 = vunpack.c.l.b16 %v218
      %v259 = vunpack.c.h.b16 %v218
      %v260 = vunpack.c.l.b16 %v219
      %v261 = vunpack.c.h.b16 %v219
      %v262 = vunpack.c.l.b16 %v220
      %v263 = vunpack.c.h.b16 %v220
      %v264 = vunpack.c.l.b16 %v221
      %v265 = vunpack.c.h.b16 %v221
      %v266 = vunpack.c.l.b16 %v222
      %v267 = vunpack.c.h.b16 %v222
      %v268 = vunpack.c.l.b16 %v223
      %v269 = vunpack.c.h.b16 %v223
      %v270 = vunpack.c.l.b16 %v224
      %v271 = vunpack.c.h.b16 %v224
      %v272 = vunpack.c.l.b16 %v225
      %v273 = vunpack.c.h.b16 %v225
      %v274 = vpack.c.b16 %v248, %v246
      %v275 = vpack.c.b16 %v249, %v247
      %v276 = vpack.c.b16 %v252, %v250
      %v277 = vpack.c.b16 %v253, %v251
      %v278 = vpack.c.b16 %v256, %v254
      %v279 = vpack.c.b16 %v257, %v255
      %v280 = vpack.c.b16 %v260, %v258
      %v281 = vpack.c.b16 %v261, %v259
      %v282 = vpack.c.b16 %v264, %v262
      %v283 = vpack.c.b16 %v265, %v263
      %v284 = vpack.c.b16 %v268, %v266
      %v285 = vpack.c.b16 %v269, %v267
      %v286 = vpack.c.b16 %v272, %v270
      %v287 = vpack.c.b16 %v273, %v271
      %vm302 = vcmask 916480
      %v304 = vsel %vm302, %v211, 0
      %306 = vmatpush.bf16.msra.mxu0 0
      %307 = vmatpush.bf16.msra.mxu0 %v286
      %308 = vmatpush.bf16.msra.mxu0 %v284
      %309 = vmatpush.bf16.msra.mxu0 %v282
      %310 = vmatpush.bf16.msra.mxu0 %v280
      %311 = vmatpush.bf16.msra.mxu0 %v278
      %312 = vmatpush.bf16.msra.mxu0 %v276
      %313 = vmatpush.bf16.msra.mxu0 %v274
      %314 = vmatmul.bf16.gmra.mxu0 %v304
      %v315 = vpop.f32.mrf.mxu0
      %v316 = vadd.f32 %v230, %v315
      %v317 = vpop.f32.mrf.mxu0
      %318 = vdwg.mxu0
      %319 = vmatpush.bf16.msra.mxu0 0
      %320 = vmatpush.bf16.msra.mxu0 %v287
      %321 = vmatpush.bf16.msra.mxu0 %v285
      %322 = vmatpush.bf16.msra.mxu0 %v283
      %323 = vmatpush.bf16.msra.mxu0 %v281
      %324 = vmatpush.bf16.msra.mxu0 %v279
      %325 = vmatpush.bf16.msra.mxu0 %v277
      %326 = vmatpush.bf16.msra.mxu0 %v275
      %327 = vmatmul.bf16.gmra.mxu0 %v304
      %v328 = vpop.f32.mrf.mxu0
      %v329 = vadd.f32 %v230, %v328
      %v330 = vpop.f32.mrf.mxu0
      %331 = vdwg.mxu0
      %v332 = vmax.f32 %v316, 0.0
      %v333 = vmax.f32 %v329, 0.0
      %334 = vst [vmem:[%s208] sm:$0xff] %v332
      %335 = vst [vmem:[%s208 + $0x8] sm:$0xff] %v333
      %s336 = smul.u32 2, %s19
      %p337 = scmp.lt.s32.totalorder %s18, 1
      %s338 = scalar_select %p337, %s18, 1
      %p339 = scmp.lt.s32.totalorder %s336, 1
      %s340 = scalar_select %p339, %s336, 1
      %s341 = smul.addr %s338, 2
      %s342 = sadd.s32 %s340, %s341
      %s343 = smul.addr %s342, 8
      %s344 = scalar_lea.vmem %s3, %s343
      // Predicated region
      $region33: #{cnn_forward.1} parent=31 // pred_check
        %p345 = pneg %p116
      $region34: #{cnn_forward.1} parent=31 // pred_check_branch
        %347 = sbr.rel (%p345) target = $region36
      $region35: #{cnn_forward.1} parent=31 // pred_region
        %s348 = smul.u32 2, %s19
      $region36: #{cnn_forward.1} parent=31 // pred_fallthru
        _
    $region32: #{cnn_forward.1} parent=5 // pred_fallthru
      _
    %p349 = scmp.le.s32.totalorder 2, %s9
    // Predicated region
    $region37: #{cnn_forward.1} parent=5 // pred_check
      %p350 = pneg %p349
    $region38: #{cnn_forward.1} parent=5 // pred_check_branch
      %352 = sbr.rel (%p350) target = $region40
    $region39: #{cnn_forward.1} parent=5 // pred_region
      %s353 = ssub.s32 %s9, 2
      // Predicated region
      $region41: #{cnn_forward.1} parent=39 // pred_check
        %p354 = pneg %p122
      $region42: #{cnn_forward.1} parent=39 // pred_check_branch
        %356 = sbr.rel (%p354) target = $region44
      $region43: #{cnn_forward.1} parent=39 // pred_region
        %s357 = smul.u32 2, %s21
        %p358 = scmp.lt.s32.totalorder %s20, 1
        %s359 = scalar_select %p358, %s20, 1
        %p360 = scmp.lt.s32.totalorder %s357, 1
        %s361 = scalar_select %p360, %s357, 1
        %s362 = smul.addr %s359, 2
        %s363 = sadd.s32 %s361, %s362
        %s364 = smul.addr %s363, 8
        %s365 = scalar_lea.vmem %s3, %s364
      $region44: #{cnn_forward.1} parent=39 // pred_fallthru
        _
    $region40: #{cnn_forward.1} parent=5 // pred_fallthru
      _
  $region6: #{cnn_forward.1} parent=0 // loop_footer
    %s13 = sadd.s32 1, %s9
  $region7: #{cnn_forward.1} parent=0 // loop_footer_branch
    %8 = sbr.rel target = $region3
  $region8: #{cnn_forward.1} parent=0 // loop_exit
    _

</llo_original>
